<compile_context>
chip_gen: v7x
topology: tpu7x:2x2x1
jax: 0.10.0
libtpu: 0.0.40
codegen_flags: <defaults>
</compile_context>

<pallas_src>
import functools

import jax
import jax.numpy as jnp
from jax import lax
from jax.experimental import pallas as pl
from jax.experimental.pallas import tpu as pltpu
import numpy as np

# ----------------------------- sizes ---------------------------------------
B = 2          # batch
OBS_DIM = 16   # observation dim
EMBED = 8      # embed_size (== all_encodings.shape[1])
HID = 32       # preprocess hidden width
PRE_OUT = 32   # preprocess_net.output_dim
ACT_DIM = 4    # prod(action_shape)
N_ENVS = 10
MAX_ACTION = 1.0


def _ru8(x):
    return (x + 7) // 8 * 8


# Packed parameter-slab layout (rows; all section starts are multiples of 8).
SLAB_COLS = max(HID, PRE_OUT)            # 32
R_W1O = 0                                 # W1[:OBS_DIM]      (16, HID)
R_W1E = OBS_DIM                           # W1[OBS_DIM:]      ( 8, HID)   row 16
R_W2 = _ru8(OBS_DIM + EMBED)              # W2                (32, PRE_OUT) row 24
R_WMUP = _ru8(R_W2 + HID)                 # Wmu[:PRE_OUT]     (32, A)     row 56
R_WMUE = R_WMUP + PRE_OUT                 # Wmu[PRE_OUT:]     ( 8, A)     row 88
R_B1 = _ru8(R_WMUE + EMBED)               # b1                ( 1, HID)   row 96
R_B2 = R_B1 + 8                           # b2                ( 1, PRE_OUT) row 104
R_BMU = R_B2 + 8                          # bmu               ( 1, A)     row 112
R_SIG = R_BMU + 8                         # sigma_param row   ( 1, A)     row 120
SLAB_ROWS = R_SIG + 8                     # 128


# ----------------------------- kernel --------------------------------------
def _fe_actor_kernel(idx_ref,                       # SMEM scalar prefetch: (B,) i32
                     obs_ref, enc_tbl_ref, slab_ref,  # VMEM inputs
                     out_ref,                        # VMEM output: (2, TB, A)
                     *, tb):
    base = pl.program_id(0) * tb

    obs = obs_ref[...]                              # (TB, O)
    enc_tbl = enc_tbl_ref[...]                      # (N_ENVS, E)

    # ---- fused gather: enc[b] = all_encodings[env_idx[base + b]] -----------
    # Build a one-hot (TB, N_ENVS) selection matrix from the SMEM indices and
    # do a tiny MXU matmul; avoids any XLA-side gather / extra HBM traffic.
    # TODO(synk): for large batch tiles, switch to an Element-based index_map
    # gather instead of the unrolled scalar-read loop below.
    row = lax.broadcasted_iota(jnp.int32, (tb, N_ENVS), 0)
    col = lax.broadcasted_iota(jnp.int32, (tb, N_ENVS), 1)
    target = jnp.zeros((tb, N_ENVS), jnp.int32)
    for b in range(tb):                             # tb is static & small here
        target = jnp.where(row == b, idx_ref[base + b], target)
    onehot = (col == target).astype(jnp.float32)
    enc = jnp.dot(onehot, enc_tbl, preferred_element_type=jnp.float32)  # (TB, E)

    # ---- static, 8-row-aligned views into the packed parameter slab --------
    w1o = slab_ref[R_W1O:R_W1O + OBS_DIM, :HID]       # (O, H)
    w1e = slab_ref[R_W1E:R_W1E + EMBED, :HID]         # (E, H)
    w2 = slab_ref[R_W2:R_W2 + HID, :PRE_OUT]          # (H, P)
    wmup = slab_ref[R_WMUP:R_WMUP + PRE_OUT, :ACT_DIM]  # (P, A)
    wmue = slab_ref[R_WMUE:R_WMUE + EMBED, :ACT_DIM]    # (E, A)
    b1 = slab_ref[R_B1:R_B1 + 1, :HID]                # (1, H)
    b2 = slab_ref[R_B2:R_B2 + 1, :PRE_OUT]            # (1, P)
    bmu = slab_ref[R_BMU:R_BMU + 1, :ACT_DIM]         # (1, A)
    sigp = slab_ref[R_SIG:R_SIG + 1, :ACT_DIM]        # (1, A)

    # preprocess layer 1: relu(concat(obs, enc) @ W1 + b1)
    h = jnp.maximum(
        jnp.dot(obs, w1o, preferred_element_type=jnp.float32)
        + jnp.dot(enc, w1e, preferred_element_type=jnp.float32)
        + b1, 0.0)
    # preprocess layer 2: relu(h @ W2 + b2)
    p = jnp.maximum(
        jnp.dot(h, w2, preferred_element_type=jnp.float32) + b2, 0.0)
    # mu head (single linear, hidden_sizes=()): concat(p, enc) @ Wmu + bmu
    mu = (jnp.dot(p, wmup, preferred_element_type=jnp.float32)
          + jnp.dot(enc, wmue, preferred_element_type=jnp.float32)
          + bmu)
    mu = MAX_ACTION * jnp.tanh(mu)                   # unbounded=False

    sigma = jnp.exp(sigp)                            # exp on (1, A) only

    out_ref[0] = mu                                  # (TB, A)
    out_ref[1] = jnp.zeros_like(mu) + sigma          # broadcast to (TB, A)


# ----------------------------- wrapper --------------------------------------
def _pack_param_slab(params):
    """Pack all weights / biases / sigma into one (SLAB_ROWS, SLAB_COLS) slab.

    Pure XLA glue (tiny, fuses for free); can be precomputed once per
    parameter set."""
    w1, b1, w2, b2, wmu, bmu, sigma_param = params
    slab = jnp.zeros((SLAB_ROWS, SLAB_COLS), jnp.float32)
    slab = slab.at[R_W1O:R_W1O + OBS_DIM + EMBED, :HID].set(w1)        # W1o|W1e
    slab = slab.at[R_W2:R_W2 + HID, :PRE_OUT].set(w2)
    slab = slab.at[R_WMUP:R_WMUP + PRE_OUT + EMBED, :ACT_DIM].set(wmu)  # Wmup|Wmue
    slab = slab.at[R_B1, :HID].set(b1)
    slab = slab.at[R_B2, :PRE_OUT].set(b2)
    slab = slab.at[R_BMU, :ACT_DIM].set(bmu)
    slab = slab.at[R_SIG, :ACT_DIM].set(sigma_param.reshape(-1))
    return slab


def function_encoder_actor_prob(obs, all_encodings, params, env_indices=None):
    """Forward pass. Returns ((mu, sigma), state=None)."""
    Bb = obs.shape[0]
    if env_indices is None:
        env_indices = np.arange(N_ENVS)[:Bb]        # default from forward()
    env_idx = jnp.asarray(env_indices, dtype=jnp.int32)

    slab = _pack_param_slab(params)

    # Batch tiling: whole batch in one block while small; beyond that a
    # "parallel" grid axis over batch blocks (shards across v7x's 2 TCs).
    tb = Bb if Bb <= 256 else 256
    assert Bb % tb == 0, "batch must be a multiple of the batch block"
    grid = (Bb // tb,)

    out = pl.pallas_call(
        functools.partial(_fe_actor_kernel, tb=tb),
        out_shape=jax.ShapeDtypeStruct((2, Bb, ACT_DIM), jnp.float32),
        grid_spec=pltpu.PrefetchScalarGridSpec(
            num_scalar_prefetch=1,                   # env indices -> SMEM
            grid=grid,
            in_specs=[
                pl.BlockSpec((tb, OBS_DIM), lambda i, idx: (i, 0)),
                pl.BlockSpec((N_ENVS, EMBED), lambda i, idx: (0, 0)),
                pl.BlockSpec((SLAB_ROWS, SLAB_COLS), lambda i, idx: (0, 0)),
            ],
            out_specs=pl.BlockSpec((2, tb, ACT_DIM), lambda i, idx: (0, i, 0)),
        ),
        compiler_params=pltpu.CompilerParams(
            dimension_semantics=("parallel",)),
    )(env_idx, obs, all_encodings, slab)

    mu, sigma = out[0], out[1]
    return (mu, sigma), None


def _reference(obs, all_encodings, params, env_indices):
    """Pure-JAX reference matching the PyTorch forward."""
    w1, b1, w2, b2, wmu, bmu, sigma_param = params
    enc = all_encodings[jnp.asarray(env_indices)]
    x = jnp.concatenate([obs, enc], axis=1)
    h = jnp.maximum(x @ w1 + b1, 0.0)
    p = jnp.maximum(h @ w2 + b2, 0.0)
    logits = jnp.concatenate([p, enc], axis=1)
    mu = MAX_ACTION * jnp.tanh(logits @ wmu + bmu)
    sigma = jnp.exp(sigma_param.reshape(1, -1) + jnp.zeros_like(mu))
    return mu, sigma


# ----------------------------- main -----------------------------------------
if __name__ == "__main__":
    key = jax.random.PRNGKey(0)
    k_obs, k_enc, k1, k2, k3, k4, k5, k6 = jax.random.split(key, 8)

    obs = jax.random.normal(k_obs, (B, OBS_DIM), dtype=jnp.float32)
    all_encodings = jax.random.normal(k_enc, (N_ENVS, EMBED), dtype=jnp.float32)

    # Synthetic parameters (shapes implied by __init__):
    #   preprocess net: Linear(O+E -> H), Linear(H -> P)  (ReLU activations)
    #   mu head:        Linear(P+E -> A)  (hidden_sizes=() -> single linear)
    #   sigma_param:    (A, 1) zeros  (nn.Parameter(torch.zeros(A, 1)))
    scale = 0.1
    w1 = scale * jax.random.normal(k1, (OBS_DIM + EMBED, HID), dtype=jnp.float32)
    b1 = scale * jax.random.normal(k2, (HID,), dtype=jnp.float32)
    w2 = scale * jax.random.normal(k3, (HID, PRE_OUT), dtype=jnp.float32)
    b2 = scale * jax.random.normal(k4, (PRE_OUT,), dtype=jnp.float32)
    wmu = scale * jax.random.normal(k5, (PRE_OUT + EMBED, ACT_DIM), dtype=jnp.float32)
    bmu = scale * jax.random.normal(k6, (ACT_DIM,), dtype=jnp.float32)
    sigma_param = jnp.zeros((ACT_DIM, 1), dtype=jnp.float32)
    params = (w1, b1, w2, b2, wmu, bmu, sigma_param)

    env_indices = np.arange(N_ENVS)[:B]
    (mu, sigma), state = function_encoder_actor_prob(obs, all_encodings, params,
                                                     env_indices)
    jax.block_until_ready((mu, sigma))

    mu_ref, sigma_ref = _reference(obs, all_encodings, params, env_indices)
    np.testing.assert_allclose(np.asarray(mu), np.asarray(mu_ref),
                               rtol=1e-5, atol=1e-5)
    np.testing.assert_allclose(np.asarray(sigma), np.asarray(sigma_ref),
                               rtol=1e-5, atol=1e-5)
    assert mu.shape == (B, ACT_DIM) and sigma.shape == (B, ACT_DIM)

    print("KERNEL_OK")
</pallas_src>

<mosaic_0001>
module attributes {stable_mosaic.version = 11 : i64} {
  func.func @_fe_actor_kernel(%arg0: i32, %arg1: memref<2xi32, #tpu.memory_space<smem>>, %arg2: memref<2x16xf32, #tpu.memory_space<vmem>>, %arg3: memref<10x8xf32, #tpu.memory_space<vmem>>, %arg4: memref<128x32xf32, #tpu.memory_space<vmem>>, %arg5: memref<2x2x4xf32, #tpu.memory_space<vmem>>) attributes {dimension_semantics = [#tpu.dimension_semantics<parallel>], iteration_bounds = array<i64: 1>, scalar_prefetch = 1 : i64, scratch_operands = 0 : i64, tpu.core_type = #tpu.core_type<tc>, window_params = [{transform_indices = @transform_0, window_bounds = array<i64: 2, 16>}, {pipeline_mode = #tpu.pipeline_mode<synchronous>, transform_indices = @transform_1, window_bounds = array<i64: 10, 8>}, {pipeline_mode = #tpu.pipeline_mode<synchronous>, transform_indices = @transform_2, window_bounds = array<i64: 128, 32>}, {transform_indices = @transform_3, window_bounds = array<i64: 2, 2, 4>}]} {
    %c2_i32 = arith.constant 2 : i32
    %0 = arith.muli %arg0, %c2_i32 : i32
    %c0 = arith.constant 0 : index
    %c0_0 = arith.constant 0 : index
    %1 = vector.load %arg2[%c0, %c0_0] : memref<2x16xf32, #tpu.memory_space<vmem>>, vector<2x16xf32>
    %c0_1 = arith.constant 0 : index
    %c0_2 = arith.constant 0 : index
    %2 = vector.load %arg3[%c0_1, %c0_2] : memref<10x8xf32, #tpu.memory_space<vmem>>, vector<10x8xf32>
    %3 = tpu.iota {dimensions = array<i32: 0>} : vector<2x10xi32>
    %4 = tpu.iota {dimensions = array<i32: 1>} : vector<2x10xi32>
    %c0_i32 = arith.constant 0 : i32
    %5 = vector.broadcast %c0_i32 : i32 to vector<2x10xi32>
    %c0_i32_3 = arith.constant 0 : i32
    %6 = vector.broadcast %c0_i32_3 : i32 to vector<2x10xi32>
    %7 = arith.cmpi eq, %3, %6 : vector<2x10xi32>
    %c0_i32_4 = arith.constant 0 : i32
    %8 = arith.addi %0, %c0_i32_4 : i32
    %9 = arith.index_cast %8 : i32 to index
    %10 = memref.load %arg1[%9] : memref<2xi32, #tpu.memory_space<smem>>
    %11 = vector.broadcast %10 : i32 to vector<2x10xi32>
    %12 = arith.select %7, %11, %5 : vector<2x10xi1>, vector<2x10xi32>
    %c1_i32 = arith.constant 1 : i32
    %13 = vector.broadcast %c1_i32 : i32 to vector<2x10xi32>
    %14 = arith.cmpi eq, %3, %13 : vector<2x10xi32>
    %c1_i32_5 = arith.constant 1 : i32
    %15 = arith.addi %0, %c1_i32_5 : i32
    %16 = arith.index_cast %15 : i32 to index
    %17 = memref.load %arg1[%16] : memref<2xi32, #tpu.memory_space<smem>>
    %18 = vector.broadcast %17 : i32 to vector<2x10xi32>
    %19 = arith.select %14, %18, %12 : vector<2x10xi1>, vector<2x10xi32>
    %20 = arith.cmpi eq, %4, %19 : vector<2x10xi32>
    %21 = arith.extui %20 : vector<2x10xi1> to vector<2x10xi32>
    %22 = arith.sitofp %21 : vector<2x10xi32> to vector<2x10xf32>
    %cst = arith.constant dense<0.000000e+00> : vector<2x8xf32>
    %23 = tpu.matmul %22, %2, %cst {dimension_numbers = #tpu.dot_dimension_numbers<[1], [0], [0], [1], [0, 0, 1, 1], [], []>} : vector<2x10xf32>, vector<10x8xf32>, vector<2x8xf32> -> vector<2x8xf32>
    %c0_6 = arith.constant 0 : index
    %c0_7 = arith.constant 0 : index
    %24 = vector.load %arg4[%c0_6, %c0_7] : memref<128x32xf32, #tpu.memory_space<vmem>>, vector<16x32xf32>
    %c16 = arith.constant 16 : index
    %c0_8 = arith.constant 0 : index
    %25 = vector.load %arg4[%c16, %c0_8] : memref<128x32xf32, #tpu.memory_space<vmem>>, vector<8x32xf32>
    %c24 = arith.constant 24 : index
    %c0_9 = arith.constant 0 : index
    %26 = vector.load %arg4[%c24, %c0_9] : memref<128x32xf32, #tpu.memory_space<vmem>>, vector<32x32xf32>
    %c56 = arith.constant 56 : index
    %c0_10 = arith.constant 0 : index
    %27 = vector.load %arg4[%c56, %c0_10] : memref<128x32xf32, #tpu.memory_space<vmem>>, vector<32x4xf32>
    %c88 = arith.constant 88 : index
    %c0_11 = arith.constant 0 : index
    %28 = vector.load %arg4[%c88, %c0_11] : memref<128x32xf32, #tpu.memory_space<vmem>>, vector<8x4xf32>
    %c96 = arith.constant 96 : index
    %c0_12 = arith.constant 0 : index
    %29 = vector.load %arg4[%c96, %c0_12] : memref<128x32xf32, #tpu.memory_space<vmem>>, vector<1x32xf32>
    %c104 = arith.constant 104 : index
    %c0_13 = arith.constant 0 : index
    %30 = vector.load %arg4[%c104, %c0_13] : memref<128x32xf32, #tpu.memory_space<vmem>>, vector<1x32xf32>
    %c112 = arith.constant 112 : index
    %c0_14 = arith.constant 0 : index
    %31 = vector.load %arg4[%c112, %c0_14] : memref<128x32xf32, #tpu.memory_space<vmem>>, vector<1x4xf32>
    %c120 = arith.constant 120 : index
    %c0_15 = arith.constant 0 : index
    %32 = vector.load %arg4[%c120, %c0_15] : memref<128x32xf32, #tpu.memory_space<vmem>>, vector<1x4xf32>
    %cst_16 = arith.constant dense<0.000000e+00> : vector<2x32xf32>
    %33 = tpu.matmul %1, %24, %cst_16 {dimension_numbers = #tpu.dot_dimension_numbers<[1], [0], [0], [1], [0, 0, 1, 1], [], []>} : vector<2x16xf32>, vector<16x32xf32>, vector<2x32xf32> -> vector<2x32xf32>
    %cst_17 = arith.constant dense<0.000000e+00> : vector<2x32xf32>
    %34 = tpu.matmul %23, %25, %cst_17 {dimension_numbers = #tpu.dot_dimension_numbers<[1], [0], [0], [1], [0, 0, 1, 1], [], []>} : vector<2x8xf32>, vector<8x32xf32>, vector<2x32xf32> -> vector<2x32xf32>
    %35 = arith.addf %33, %34 : vector<2x32xf32>
    %36 = vector.broadcast %29 : vector<1x32xf32> to vector<2x32xf32>
    %37 = arith.addf %35, %36 : vector<2x32xf32>
    %cst_18 = arith.constant 0.000000e+00 : f32
    %38 = vector.broadcast %cst_18 : f32 to vector<2x32xf32>
    %39 = arith.maximumf %37, %38 : vector<2x32xf32>
    %cst_19 = arith.constant dense<0.000000e+00> : vector<2x32xf32>
    %40 = tpu.matmul %39, %26, %cst_19 {dimension_numbers = #tpu.dot_dimension_numbers<[1], [0], [0], [1], [0, 0, 1, 1], [], []>} : vector<2x32xf32>, vector<32x32xf32>, vector<2x32xf32> -> vector<2x32xf32>
    %41 = vector.broadcast %30 : vector<1x32xf32> to vector<2x32xf32>
    %42 = arith.addf %40, %41 : vector<2x32xf32>
    %cst_20 = arith.constant 0.000000e+00 : f32
    %43 = vector.broadcast %cst_20 : f32 to vector<2x32xf32>
    %44 = arith.maximumf %42, %43 : vector<2x32xf32>
    %cst_21 = arith.constant dense<0.000000e+00> : vector<2x4xf32>
    %45 = tpu.matmul %44, %27, %cst_21 {dimension_numbers = #tpu.dot_dimension_numbers<[1], [0], [0], [1], [0, 0, 1, 1], [], []>} : vector<2x32xf32>, vector<32x4xf32>, vector<2x4xf32> -> vector<2x4xf32>
    %cst_22 = arith.constant dense<0.000000e+00> : vector<2x4xf32>
    %46 = tpu.matmul %23, %28, %cst_22 {dimension_numbers = #tpu.dot_dimension_numbers<[1], [0], [0], [1], [0, 0, 1, 1], [], []>} : vector<2x8xf32>, vector<8x4xf32>, vector<2x4xf32> -> vector<2x4xf32>
    %47 = arith.addf %45, %46 : vector<2x4xf32>
    %48 = vector.broadcast %31 : vector<1x4xf32> to vector<2x4xf32>
    %49 = arith.addf %47, %48 : vector<2x4xf32>
    %50 = math.tanh %49 : vector<2x4xf32>
    %cst_23 = arith.constant 1.000000e+00 : f32
    %51 = vector.broadcast %cst_23 : f32 to vector<2x4xf32>
    %52 = arith.mulf %51, %50 : vector<2x4xf32>
    %53 = math.exp %32 : vector<1x4xf32>
    %c0_24 = arith.constant 0 : index
    %c0_25 = arith.constant 0 : index
    %c0_26 = arith.constant 0 : index
    %54 = vector.load %arg5[%c0_24, %c0_25, %c0_26] : memref<2x2x4xf32, #tpu.memory_space<vmem>>, vector<1x2x4xf32>
    %55 = vector.shape_cast %54 : vector<1x2x4xf32> to vector<2x4xf32>
    %56 = vector.shape_cast %52 : vector<2x4xf32> to vector<1x2x4xf32>
    tpu.vector_store %arg5[%c0_24, %c0_25, %c0_26], %56 {strides = array<i32>} : memref<2x2x4xf32, #tpu.memory_space<vmem>>, vector<1x2x4xf32>,
    %cst_27 = arith.constant 0.000000e+00 : f32
    %57 = vector.broadcast %cst_27 : f32 to vector<2x4xf32>
    %58 = vector.broadcast %53 : vector<1x4xf32> to vector<2x4xf32>
    %59 = arith.addf %57, %58 : vector<2x4xf32>
    %c1 = arith.constant 1 : index
    %c0_28 = arith.constant 0 : index
    %c0_29 = arith.constant 0 : index
    %60 = vector.load %arg5[%c1, %c0_28, %c0_29] : memref<2x2x4xf32, #tpu.memory_space<vmem>>, vector<1x2x4xf32>
    %61 = vector.shape_cast %60 : vector<1x2x4xf32> to vector<2x4xf32>
    %62 = vector.shape_cast %59 : vector<2x4xf32> to vector<1x2x4xf32>
    tpu.vector_store %arg5[%c1, %c0_28, %c0_29], %62 {strides = array<i32>} : memref<2x2x4xf32, #tpu.memory_space<vmem>>, vector<1x2x4xf32>,
    return
  }
  func.func @transform_0(%arg0: i32, %arg1: memref<2xi32, #tpu.memory_space<smem>>) -> (i32, i32) {
    %c0_i32 = arith.constant 0 : i32
    %c0_i32_0 = arith.constant 0 : i32
    return %arg0, %c0_i32 : i32, i32
  }
  func.func @transform_1(%arg0: i32, %arg1: memref<2xi32, #tpu.memory_space<smem>>) -> (i32, i32) {
    %c0_i32 = arith.constant 0 : i32
    %c0_i32_0 = arith.constant 0 : i32
    %c0_i32_1 = arith.constant 0 : i32
    return %c0_i32, %c0_i32_0 : i32, i32
  }
  func.func @transform_2(%arg0: i32, %arg1: memref<2xi32, #tpu.memory_space<smem>>) -> (i32, i32) {
    %c0_i32 = arith.constant 0 : i32
    %c0_i32_0 = arith.constant 0 : i32
    %c0_i32_1 = arith.constant 0 : i32
    return %c0_i32, %c0_i32_0 : i32, i32
  }
  func.func @transform_3(%arg0: i32, %arg1: memref<2xi32, #tpu.memory_space<smem>>) -> (i32, i32, i32) {
    %c0_i32 = arith.constant 0 : i32
    %c0_i32_0 = arith.constant 0 : i32
    %c0_i32_1 = arith.constant 0 : i32
    return %c0_i32, %arg0, %c0_i32_0 : i32, i32, i32
  }
}

</mosaic_0001>

<llo_original>
// kernel: tpu_custom_call.1
$region0: #{tpu_custom_call.1}
  #allocation0 [shape = 'u32[]', space=smem, size = 0x4, offset = 0x4, fixed_abs, tag = 'smem constant byte address 0x4 - core index']
  #allocation1 [shape = 'u32[144,128]{1,0:T(1,128)}', space=vmem, size = 0x12000, scoped, tag = 'internal scratch']
  #allocation2 [shape = 's32[1]{0}', space=sflag, size = 0x4, scoped, tag = 'scoped memory for tpu_custom_call.1']
  #allocation3 [shape = 'u8[512]{0}', space=smem, size = 0x200, scoped, tag = 'prefetched SMEM operand 0']
  %s0 = inlined_call_operand.vmem [shape: s32[2], index: 0, kind: input, shape index: {}]
  %s1 = inlined_call_operand.vmem [shape: f32[2,16], index: 1, kind: input, shape index: {}]
  %s2 = inlined_call_operand.vmem [shape: f32[10,8], index: 2, kind: input, shape index: {}]
  %s3 = inlined_call_operand.vmem [shape: f32[128,32], index: 3, kind: input, shape index: {}]
  %s4 = inlined_call_operand.hbm [shape: f32[2,2,4], index: 4, kind: output, shape index: {}]
  %s5 = sld [smem:[#allocation0]]
  $region22: #{tpu_custom_call.1} parent=0
    _
  %s7 = ssub.s32 1, %s5
  %s8 = scalar_select 0, %s7, %s5
  %s9 = sshll.u32 %s0, 4
  %s10 = int_to_ptr.vmem [resolvable:$true] %s9
  %12 = dma.vmem_to_smem %s10, 16, [#allocation3], [#allocation2]
  %13 = dma.done [#allocation2], 16
  %14 = sfence
  $region1: #{tpu_custom_call.1} parent=0
    #allocation4 [shape = 'u8[2048]{0}', space=vmem, size = 0x800, scoped, tag = 'output window, operand 0, single buffered']
    #allocation5 [shape = 's32[1]{0}', space=sflag, size = 0x4, scoped, tag = 'scoped memory for tpu_custom_call.1']
    %15 = vsyncpa [#allocation5], 0
    // Predicated region
    $region2: #{tpu_custom_call.1} parent=1 // pred_check
      _
    $region3: #{tpu_custom_call.1} parent=1 // pred_check_branch
      %17 = sbr.rel (0) target = $region5
    $region4: #{tpu_custom_call.1} parent=1 // pred_region
      _
    $region5: #{tpu_custom_call.1} parent=1 // pred_fallthru
      _
    // Predicated region
    $region6: #{tpu_custom_call.1} parent=1 // pred_check
      _
    $region7: #{tpu_custom_call.1} parent=1 // pred_check_branch
      %19 = sbr.rel (0) target = $region9
    $region8: #{tpu_custom_call.1} parent=1 // pred_region
      _
    $region9: #{tpu_custom_call.1} parent=1 // pred_fallthru
      _
    // Predicated region
    $region10: #{tpu_custom_call.1} parent=1 // pred_check
      _
    $region11: #{tpu_custom_call.1} parent=1 // pred_check_branch
      %21 = sbr.rel (0) target = $region13
    $region12: #{tpu_custom_call.1} parent=1 // pred_region
      _
    $region13: #{tpu_custom_call.1} parent=1 // pred_fallthru
      _
    %s22 = smul.u32 0, 2
    %v23 = vld [vmem:[%s1] sm:$0x3]
    %v24 = vld [vmem:[%s2] sm:$0xff]
    %v25 = vld [vmem:[%s2 + $0x8] sm:$0x3]
    %v26 = vlaneseq
    %v27 = vshrl.u32 %v26, 7
    %v28 = vlaneseq
    %v29 = vand.u32 %v28, 127
    %vm30 = vcmp.eq.s32.totalorder %v27, 0
    %s31 = sld [smem:[#allocation3 + %s22]]
    %v32 = vstv %s31
    %v33 = vsel %vm30, %v32, 0
    %vm34 = vcmp.eq.s32.totalorder %v27, 1
    %s35 = sadd.s32 %s22, 1
    %s36 = sld [smem:[#allocation3 + %s35]]
    %v37 = vstv %s36
    %v38 = vsel %vm34, %v37, %v33
    %vm39 = vcmp.eq.s32.totalorder %v29, %v38
    %v40 = vsel %vm39, 1, 0
    %v41 = vcvt.s32.f32 %v40
    %vm42 = vcmask 80896
    %v44 = vsel %vm42, %v41, 0
    %vm46 = vcmask 1041408
    %v48 = vsel %vm46, %v25, 0
    %50 = vmatprep.subr.mxu0 0.0
    %51 = vmatpush1.msra.mxu0 %v24
    %52 = vmatprep.subr.mxu0 0.0
    %53 = vmatpush1.msra.mxu0 %v48
    %54 = vmatprep.subr.mxu0 0.0
    %55 = vmatpush1.msra.mxu0 0.0
    %56 = vmatprep.subr.mxu0 0.0
    %57 = vmatpush1.msra.mxu0 0.0
    %58 = vmatprep.subr.mxu0 0.0
    %59 = vmatpush1.msra.mxu0 0.0
    %60 = vmatprep.subr.mxu0 0.0
    %61 = vmatpush1.msra.mxu0 0.0
    %62 = vmatprep.subr.mxu0 0.0
    %63 = vmatpush1.msra.mxu0 0.0
    %64 = vmatprep.subr.mxu0 0.0
    %65 = vmatpush1.msra.mxu0 0.0
    %66 = vmatprep.subr.mxu0 0.0
    %67 = vmatpush1.msra.mxu0 0.0
    %68 = vmatprep.subr.mxu0 0.0
    %69 = vmatpush1.msra.mxu0 0.0
    %70 = vmatprep.subr.mxu0 0.0
    %71 = vmatpush1.msra.mxu0 0.0
    %72 = vmatprep.subr.mxu0 0.0
    %73 = vmatpush1.msra.mxu0 0.0
    %74 = vmatprep.subr.mxu0 0.0
    %75 = vmatpush1.msra.mxu0 0.0
    %76 = vmatprep.subr.mxu0 0.0
    %77 = vmatpush1.msra.mxu0 0.0
    %78 = vmatprep.subr.mxu0 0.0
    %79 = vmatpush1.msra.mxu0 0.0
    %80 = vmatprep.subr.mxu0 0.0
    %81 = vmatpush1.msra.mxu0 0.0
    %82 = vmatprep.subr.mxu0 0.0
    %83 = vmatpush1.msra.mxu0 0.0
    %84 = vmatprep.subr.mxu0 0.0
    %85 = vmatpush1.msra.mxu0 0.0
    %86 = vmatprep.subr.mxu0 0.0
    %87 = vmatpush1.msra.mxu0 0.0
    %88 = vmatprep.subr.mxu0 0.0
    %89 = vmatpush1.msra.mxu0 0.0
    %90 = vmatprep.subr.mxu0 0.0
    %91 = vmatpush1.msra.mxu0 0.0
    %92 = vmatprep.subr.mxu0 0.0
    %93 = vmatpush1.msra.mxu0 0.0
    %94 = vmatprep.subr.mxu0 0.0
    %95 = vmatpush1.msra.mxu0 0.0
    %96 = vmatprep.subr.mxu0 0.0
    %97 = vmatpush1.msra.mxu0 0.0
    %98 = vmatprep.subr.mxu0 0.0
    %99 = vmatpush1.msra.mxu0 0.0
    %100 = vmatprep.subr.mxu0 0.0
    %101 = vmatpush1.msra.mxu0 0.0
    %102 = vmatprep.subr.mxu0 0.0
    %103 = vmatpush1.msra.mxu0 0.0
    %104 = vmatprep.subr.mxu0 0.0
    %105 = vmatpush1.msra.mxu0 0.0
    %106 = vmatprep.subr.mxu0 0.0
    %107 = vmatpush1.msra.mxu0 0.0
    %108 = vmatprep.subr.mxu0 0.0
    %109 = vmatpush1.msra.mxu0 0.0
    %110 = vmatprep.subr.mxu0 0.0
    %111 = vmatpush1.msra.mxu0 0.0
    %112 = vmatprep.subr.mxu0 0.0
    %113 = vmatpush1.msra.mxu0 0.0
    %114 = vmatprep.mubr.f32.mxu0 0.0
    %115 = vmatmul.mubr.f32.gmra.mrb[0].mxu0 %v44
    %v116 = vpop.f32.mrb[0].mxu0
    %v117 = vadd.f32 0.0, %v116
    %v118 = vpop.f32.mrb[0].mxu0
    %119 = vdwg.mxu0
    %v120 = vld [vmem:[%s3] sm:$0xff]
    %v121 = vld [vmem:[%s3 + $0x8] sm:$0xff]
    %v122 = vld [vmem:[%s3 + $0x10] sm:$0xff]
    %v123 = vld [vmem:[%s3 + $0x18] sm:$0xff]
    %v124 = vld [vmem:[%s3 + $0x20] sm:$0xff]
    %v125 = vld [vmem:[%s3 + $0x28] sm:$0xff]
    %v126 = vld [vmem:[%s3 + $0x30] sm:$0xff]
    %v127 = vld [vmem:[%s3 + $0x38] sm:$0xff]
    %v128 = vld [vmem:[%s3 + $0x40] sm:$0xff]
    %v129 = vld [vmem:[%s3 + $0x48] sm:$0xff]
    %v130 = vld [vmem:[%s3 + $0x50] sm:$0xff]
    %v131 = vld [vmem:[%s3 + $0x58] sm:$0xff]
    %v132 = vld [vmem:[%s3 + $0x60] sm:$0x1]
    %v133 = vld [vmem:[%s3 + $0x68] sm:$0x1]
    %v134 = vld [vmem:[%s3 + $0x70] sm:$0x1]
    %v135 = vld [vmem:[%s3 + $0x78] sm:$0x1]
    %vm136 = vcmask 64512
    %v138 = vsel %vm136, %v117, 0
    %140 = vmatprep.subr.mxu0 0.0
    %141 = vmatpush1.msra.mxu0 %v122
    %142 = vmatprep.subr.mxu0 0.0
    %143 = vmatpush1.msra.mxu0 0.0
    %144 = vmatprep.subr.mxu0 0.0
    %145 = vmatpush1.msra.mxu0 0.0
    %146 = vmatprep.subr.mxu0 0.0
    %147 = vmatpush1.msra.mxu0 0.0
    %148 = vmatprep.subr.mxu0 0.0
    %149 = vmatpush1.msra.mxu0 0.0
    %150 = vmatprep.subr.mxu0 0.0
    %151 = vmatpush1.msra.mxu0 0.0
    %152 = vmatprep.subr.mxu0 0.0
    %153 = vmatpush1.msra.mxu0 0.0
    %154 = vmatprep.subr.mxu0 0.0
    %155 = vmatpush1.msra.mxu0 0.0
    %156 = vmatprep.subr.mxu0 0.0
    %157 = vmatpush1.msra.mxu0 0.0
    %158 = vmatprep.subr.mxu0 0.0
    %159 = vmatpush1.msra.mxu0 0.0
    %160 = vmatprep.subr.mxu0 0.0
    %161 = vmatpush1.msra.mxu0 0.0
    %162 = vmatprep.subr.mxu0 0.0
    %163 = vmatpush1.msra.mxu0 0.0
    %164 = vmatprep.subr.mxu0 0.0
    %165 = vmatpush1.msra.mxu0 0.0
    %166 = vmatprep.subr.mxu0 0.0
    %167 = vmatpush1.msra.mxu0 0.0
    %168 = vmatprep.subr.mxu0 0.0
    %169 = vmatpush1.msra.mxu0 0.0
    %170 = vmatprep.subr.mxu0 0.0
    %171 = vmatpush1.msra.mxu0 0.0
    %172 = vmatprep.subr.mxu0 0.0
    %173 = vmatpush1.msra.mxu0 0.0
    %174 = vmatprep.subr.mxu0 0.0
    %175 = vmatpush1.msra.mxu0 0.0
    %176 = vmatprep.subr.mxu0 0.0
    %177 = vmatpush1.msra.mxu0 0.0
    %178 = vmatprep.subr.mxu0 0.0
    %179 = vmatpush1.msra.mxu0 0.0
    %180 = vmatprep.subr.mxu0 0.0
    %181 = vmatpush1.msra.mxu0 0.0
    %182 = vmatprep.subr.mxu0 0.0
    %183 = vmatpush1.msra.mxu0 0.0
    %184 = vmatprep.subr.mxu0 0.0
    %185 = vmatpush1.msra.mxu0 0.0
    %186 = vmatprep.subr.mxu0 0.0
    %187 = vmatpush1.msra.mxu0 0.0
    %188 = vmatprep.subr.mxu0 0.0
    %189 = vmatpush1.msra.mxu0 0.0
    %190 = vmatprep.subr.mxu0 0.0
    %191 = vmatpush1.msra.mxu0 0.0
    %192 = vmatprep.subr.mxu0 0.0
    %193 = vmatpush1.msra.mxu0 0.0
    %194 = vmatprep.subr.mxu0 0.0
    %195 = vmatpush1.msra.mxu0 0.0
    %196 = vmatprep.subr.mxu0 0.0
    %197 = vmatpush1.msra.mxu0 0.0
    %198 = vmatprep.subr.mxu0 0.0
    %199 = vmatpush1.msra.mxu0 0.0
    %200 = vmatprep.subr.mxu0 0.0
    %201 = vmatpush1.msra.mxu0 0.0
    %202 = vmatprep.subr.mxu0 0.0
    %203 = vmatpush1.msra.mxu0 0.0
    %204 = vmatprep.mubr.f32.mxu0 0.0
    %205 = vmatmul.mubr.f32.gmra.mrb[0].mxu0 %v138
    %v206 = vpop.f32.mrb[0].mxu0
    %v207 = vadd.f32 0.0, %v206
    %v208 = vpop.f32.mrb[0].mxu0
    %209 = vdwg.mxu0
    %vm210 = vcmask 130048
    %v212 = vsel %vm210, %v23, 0
    %214 = vmatprep.subr.mxu0 0.0
    %215 = vmatpush1.msra.mxu0 %v120
    %216 = vmatprep.subr.mxu0 0.0
    %217 = vmatpush1.msra.mxu0 %v121
    %218 = vmatprep.subr.mxu0 0.0
    %219 = vmatpush1.msra.mxu0 0.0
    %220 = vmatprep.subr.mxu0 0.0
    %221 = vmatpush1.msra.mxu0 0.0
    %222 = vmatprep.subr.mxu0 0.0
    %223 = vmatpush1.msra.mxu0 0.0
    %224 = vmatprep.subr.mxu0 0.0
    %225 = vmatpush1.msra.mxu0 0.0
    %226 = vmatprep.subr.mxu0 0.0
    %227 = vmatpush1.msra.mxu0 0.0
    %228 = vmatprep.subr.mxu0 0.0
    %229 = vmatpush1.msra.mxu0 0.0
    %230 = vmatprep.subr.mxu0 0.0
    %231 = vmatpush1.msra.mxu0 0.0
    %232 = vmatprep.subr.mxu0 0.0
    %233 = vmatpush1.msra.mxu0 0.0
    %234 = vmatprep.subr.mxu0 0.0
    %235 = vmatpush1.msra.mxu0 0.0
    %236 = vmatprep.subr.mxu0 0.0
    %237 = vmatpush1.msra.mxu0 0.0
    %238 = vmatprep.subr.mxu0 0.0
    %239 = vmatpush1.msra.mxu0 0.0
    %240 = vmatprep.subr.mxu0 0.0
    %241 = vmatpush1.msra.mxu0 0.0
    %242 = vmatprep.subr.mxu0 0.0
    %243 = vmatpush1.msra.mxu0 0.0
    %244 = vmatprep.subr.mxu0 0.0
    %245 = vmatpush1.msra.mxu0 0.0
    %246 = vmatprep.subr.mxu0 0.0
    %247 = vmatpush1.msra.mxu0 0.0
    %248 = vmatprep.subr.mxu0 0.0
    %249 = vmatpush1.msra.mxu0 0.0
    %250 = vmatprep.subr.mxu0 0.0
    %251 = vmatpush1.msra.mxu0 0.0
    %252 = vmatprep.subr.mxu0 0.0
    %253 = vmatpush1.msra.mxu0 0.0
    %254 = vmatprep.subr.mxu0 0.0
    %255 = vmatpush1.msra.mxu0 0.0
    %256 = vmatprep.subr.mxu0 0.0
    %257 = vmatpush1.msra.mxu0 0.0
    %258 = vmatprep.subr.mxu0 0.0
    %259 = vmatpush1.msra.mxu0 0.0
    %260 = vmatprep.subr.mxu0 0.0
    %261 = vmatpush1.msra.mxu0 0.0
    %262 = vmatprep.subr.mxu0 0.0
    %263 = vmatpush1.msra.mxu0 0.0
    %264 = vmatprep.subr.mxu0 0.0
    %265 = vmatpush1.msra.mxu0 0.0
    %266 = vmatprep.subr.mxu0 0.0
    %267 = vmatpush1.msra.mxu0 0.0
    %268 = vmatprep.subr.mxu0 0.0
    %269 = vmatpush1.msra.mxu0 0.0
    %270 = vmatprep.subr.mxu0 0.0
    %271 = vmatpush1.msra.mxu0 0.0
    %272 = vmatprep.subr.mxu0 0.0
    %273 = vmatpush1.msra.mxu0 0.0
    %274 = vmatprep.subr.mxu0 0.0
    %275 = vmatpush1.msra.mxu0 0.0
    %276 = vmatprep.subr.mxu0 0.0
    %277 = vmatpush1.msra.mxu0 0.0
    %278 = vmatprep.mubr.f32.mxu0 0.0
    %279 = vmatmul.mubr.f32.gmra.mrb[0].mxu0 %v212
    %v280 = vpop.f32.mrb[0].mxu0
    %v281 = vadd.f32 %v207, %v280
    %v282 = vpop.f32.mrb[0].mxu0
    %283 = vdwg.mxu0
    %v284 = vlaneseq
    %v285 = vshrl.u32 %v284, 7
    %v286 = vsub.s32 0, %v285
    %v287 = vrot.slane %v132, %v286
    %v288 = vadd.f32 %v281, %v287
    %v289 = vmax.f32 %v288, 0.0
    %v290 = vlaneseq
    %v291 = vshrl.u32 %v290, 7
    %v292 = vsub.s32 0, %v291
    %v293 = vrot.slane %v133, %v292
    %vm294 = vcmask 261120
    %v296 = vsel %vm294, %v289, 0
    %298 = vmatprep.subr.mxu0 0.0
    %299 = vmatpush1.msra.mxu0 %v123
    %300 = vmatprep.subr.mxu0 0.0
    %301 = vmatpush1.msra.mxu0 %v124
    %302 = vmatprep.subr.mxu0 0.0
    %303 = vmatpush1.msra.mxu0 %v125
    %304 = vmatprep.subr.mxu0 0.0
    %305 = vmatpush1.msra.mxu0 %v126
    %306 = vmatprep.subr.mxu0 0.0
    %307 = vmatpush1.msra.mxu0 0.0
    %308 = vmatprep.subr.mxu0 0.0
    %309 = vmatpush1.msra.mxu0 0.0
    %310 = vmatprep.subr.mxu0 0.0
    %311 = vmatpush1.msra.mxu0 0.0
    %312 = vmatprep.subr.mxu0 0.0
    %313 = vmatpush1.msra.mxu0 0.0
    %314 = vmatprep.subr.mxu0 0.0
    %315 = vmatpush1.msra.mxu0 0.0
    %316 = vmatprep.subr.mxu0 0.0
    %317 = vmatpush1.msra.mxu0 0.0
    %318 = vmatprep.subr.mxu0 0.0
    %319 = vmatpush1.msra.mxu0 0.0
    %320 = vmatprep.subr.mxu0 0.0
    %321 = vmatpush1.msra.mxu0 0.0
    %322 = vmatprep.subr.mxu0 0.0
    %323 = vmatpush1.msra.mxu0 0.0
    %324 = vmatprep.subr.mxu0 0.0
    %325 = vmatpush1.msra.mxu0 0.0
    %326 = vmatprep.subr.mxu0 0.0
    %327 = vmatpush1.msra.mxu0 0.0
    %328 = vmatprep.subr.mxu0 0.0
    %329 = vmatpush1.msra.mxu0 0.0
    %330 = vmatprep.subr.mxu0 0.0
    %331 = vmatpush1.msra.mxu0 0.0
    %332 = vmatprep.subr.mxu0 0.0
    %333 = vmatpush1.msra.mxu0 0.0
    %334 = vmatprep.subr.mxu0 0.0
    %335 = vmatpush1.msra.mxu0 0.0
    %336 = vmatprep.subr.mxu0 0.0
    %337 = vmatpush1.msra.mxu0 0.0
    %338 = vmatprep.subr.mxu0 0.0
    %339 = vmatpush1.msra.mxu0 0.0
    %340 = vmatprep.subr.mxu0 0.0
    %341 = vmatpush1.msra.mxu0 0.0
    %342 = vmatprep.subr.mxu0 0.0
    %343 = vmatpush1.msra.mxu0 0.0
    %344 = vmatprep.subr.mxu0 0.0
    %345 = vmatpush1.msra.mxu0 0.0
    %346 = vmatprep.subr.mxu0 0.0
    %347 = vmatpush1.msra.mxu0 0.0
    %348 = vmatprep.subr.mxu0 0.0
    %349 = vmatpush1.msra.mxu0 0.0
    %350 = vmatprep.subr.mxu0 0.0
    %351 = vmatpush1.msra.mxu0 0.0
    %352 = vmatprep.subr.mxu0 0.0
    %353 = vmatpush1.msra.mxu0 0.0
    %354 = vmatprep.subr.mxu0 0.0
    %355 = vmatpush1.msra.mxu0 0.0
    %356 = vmatprep.subr.mxu0 0.0
    %357 = vmatpush1.msra.mxu0 0.0
    %358 = vmatprep.subr.mxu0 0.0
    %359 = vmatpush1.msra.mxu0 0.0
    %360 = vmatprep.subr.mxu0 0.0
    %361 = vmatpush1.msra.mxu0 0.0
    %362 = vmatprep.mubr.f32.mxu0 0.0
    %363 = vmatmul.mubr.f32.gmra.mrb[0].mxu0 %v296
    %v364 = vpop.f32.mrb[0].mxu0
    %v365 = vadd.f32 %v293, %v364
    %v366 = vpop.f32.mrb[0].mxu0
    %367 = vdwg.mxu0
    %v368 = vmax.f32 %v365, 0.0
    %369 = vmatprep.subr.mxu0 0.0
    %370 = vmatpush1.msra.mxu0 %v131
    %371 = vmatprep.subr.mxu0 0.0
    %372 = vmatpush1.msra.mxu0 0.0
    %373 = vmatprep.subr.mxu0 0.0
    %374 = vmatpush1.msra.mxu0 0.0
    %375 = vmatprep.subr.mxu0 0.0
    %376 = vmatpush1.msra.mxu0 0.0
    %377 = vmatprep.subr.mxu0 0.0
    %378 = vmatpush1.msra.mxu0 0.0
    %379 = vmatprep.subr.mxu0 0.0
    %380 = vmatpush1.msra.mxu0 0.0
    %381 = vmatprep.subr.mxu0 0.0
    %382 = vmatpush1.msra.mxu0 0.0
    %383 = vmatprep.subr.mxu0 0.0
    %384 = vmatpush1.msra.mxu0 0.0
    %385 = vmatprep.subr.mxu0 0.0
    %386 = vmatpush1.msra.mxu0 0.0
    %387 = vmatprep.subr.mxu0 0.0
    %388 = vmatpush1.msra.mxu0 0.0
    %389 = vmatprep.subr.mxu0 0.0
    %390 = vmatpush1.msra.mxu0 0.0
    %391 = vmatprep.subr.mxu0 0.0
    %392 = vmatpush1.msra.mxu0 0.0
    %393 = vmatprep.subr.mxu0 0.0
    %394 = vmatpush1.msra.mxu0 0.0
    %395 = vmatprep.subr.mxu0 0.0
    %396 = vmatpush1.msra.mxu0 0.0
    %397 = vmatprep.subr.mxu0 0.0
    %398 = vmatpush1.msra.mxu0 0.0
    %399 = vmatprep.subr.mxu0 0.0
    %400 = vmatpush1.msra.mxu0 0.0
    %401 = vmatprep.subr.mxu0 0.0
    %402 = vmatpush1.msra.mxu0 0.0
    %403 = vmatprep.subr.mxu0 0.0
    %404 = vmatpush1.msra.mxu0 0.0
    %405 = vmatprep.subr.mxu0 0.0
    %406 = vmatpush1.msra.mxu0 0.0
    %407 = vmatprep.subr.mxu0 0.0
    %408 = vmatpush1.msra.mxu0 0.0
    %409 = vmatprep.subr.mxu0 0.0
    %410 = vmatpush1.msra.mxu0 0.0
    %411 = vmatprep.subr.mxu0 0.0
    %412 = vmatpush1.msra.mxu0 0.0
    %413 = vmatprep.subr.mxu0 0.0
    %414 = vmatpush1.msra.mxu0 0.0
    %415 = vmatprep.subr.mxu0 0.0
    %416 = vmatpush1.msra.mxu0 0.0
    %417 = vmatprep.subr.mxu0 0.0
    %418 = vmatpush1.msra.mxu0 0.0
    %419 = vmatprep.subr.mxu0 0.0
    %420 = vmatpush1.msra.mxu0 0.0
    %421 = vmatprep.subr.mxu0 0.0
    %422 = vmatpush1.msra.mxu0 0.0
    %423 = vmatprep.subr.mxu0 0.0
    %424 = vmatpush1.msra.mxu0 0.0
    %425 = vmatprep.subr.mxu0 0.0
    %426 = vmatpush1.msra.mxu0 0.0
    %427 = vmatprep.subr.mxu0 0.0
    %428 = vmatpush1.msra.mxu0 0.0
    %429 = vmatprep.subr.mxu0 0.0
    %430 = vmatpush1.msra.mxu0 0.0
    %431 = vmatprep.subr.mxu0 0.0
    %432 = vmatpush1.msra.mxu0 0.0
    %433 = vmatprep.mubr.f32.mxu0 0.0
    %434 = vmatmul.mubr.f32.gmra.mrb[0].mxu0 %v138
    %v435 = vpop.f32.mrb[0].mxu0
    %v436 = vadd.f32 0.0, %v435
    %v437 = vpop.f32.mrb[0].mxu0
    %438 = vdwg.mxu0
    %v440 = vsel %vm294, %v368, 0
    %442 = vmatprep.subr.mxu0 0.0
    %443 = vmatpush1.msra.mxu0 %v127
    %444 = vmatprep.subr.mxu0 0.0
    %445 = vmatpush1.msra.mxu0 %v128
    %446 = vmatprep.subr.mxu0 0.0
    %447 = vmatpush1.msra.mxu0 %v129
    %448 = vmatprep.subr.mxu0 0.0
    %449 = vmatpush1.msra.mxu0 %v130
    %450 = vmatprep.subr.mxu0 0.0
    %451 = vmatpush1.msra.mxu0 0.0
    %452 = vmatprep.subr.mxu0 0.0
    %453 = vmatpush1.msra.mxu0 0.0
    %454 = vmatprep.subr.mxu0 0.0
    %455 = vmatpush1.msra.mxu0 0.0
    %456 = vmatprep.subr.mxu0 0.0
    %457 = vmatpush1.msra.mxu0 0.0
    %458 = vmatprep.subr.mxu0 0.0
    %459 = vmatpush1.msra.mxu0 0.0
    %460 = vmatprep.subr.mxu0 0.0
    %461 = vmatpush1.msra.mxu0 0.0
    %462 = vmatprep.subr.mxu0 0.0
    %463 = vmatpush1.msra.mxu0 0.0
    %464 = vmatprep.subr.mxu0 0.0
    %465 = vmatpush1.msra.mxu0 0.0
    %466 = vmatprep.subr.mxu0 0.0
    %467 = vmatpush1.msra.mxu0 0.0
    %468 = vmatprep.subr.mxu0 0.0
    %469 = vmatpush1.msra.mxu0 0.0
    %470 = vmatprep.subr.mxu0 0.0
    %471 = vmatpush1.msra.mxu0 0.0
    %472 = vmatprep.subr.mxu0 0.0
    %473 = vmatpush1.msra.mxu0 0.0
    %474 = vmatprep.subr.mxu0 0.0
    %475 = vmatpush1.msra.mxu0 0.0
    %476 = vmatprep.subr.mxu0 0.0
    %477 = vmatpush1.msra.mxu0 0.0
    %478 = vmatprep.subr.mxu0 0.0
    %479 = vmatpush1.msra.mxu0 0.0
    %480 = vmatprep.subr.mxu0 0.0
    %481 = vmatpush1.msra.mxu0 0.0
    %482 = vmatprep.subr.mxu0 0.0
    %483 = vmatpush1.msra.mxu0 0.0
    %484 = vmatprep.subr.mxu0 0.0
    %485 = vmatpush1.msra.mxu0 0.0
    %486 = vmatprep.subr.mxu0 0.0
    %487 = vmatpush1.msra.mxu0 0.0
    %488 = vmatprep.subr.mxu0 0.0
    %489 = vmatpush1.msra.mxu0 0.0
    %490 = vmatprep.subr.mxu0 0.0
    %491 = vmatpush1.msra.mxu0 0.0
    %492 = vmatprep.subr.mxu0 0.0
    %493 = vmatpush1.msra.mxu0 0.0
    %494 = vmatprep.subr.mxu0 0.0
    %495 = vmatpush1.msra.mxu0 0.0
    %496 = vmatprep.subr.mxu0 0.0
    %497 = vmatpush1.msra.mxu0 0.0
    %498 = vmatprep.subr.mxu0 0.0
    %499 = vmatpush1.msra.mxu0 0.0
    %500 = vmatprep.subr.mxu0 0.0
    %501 = vmatpush1.msra.mxu0 0.0
    %502 = vmatprep.subr.mxu0 0.0
    %503 = vmatpush1.msra.mxu0 0.0
    %504 = vmatprep.subr.mxu0 0.0
    %505 = vmatpush1.msra.mxu0 0.0
    %506 = vmatprep.mubr.f32.mxu0 0.0
    %507 = vmatmul.mubr.f32.gmra.mrb[0].mxu0 %v440
    %v508 = vpop.f32.mrb[0].mxu0
    %v509 = vadd.f32 %v436, %v508
    %v510 = vpop.f32.mrb[0].mxu0
    %511 = vdwg.mxu0
    %v512 = vlaneseq
    %v513 = vshrl.u32 %v512, 7
    %v514 = vsub.s32 0, %v513
    %v515 = vrot.slane %v134, %v514
    %v516 = vadd.f32 %v509, %v515
    %v517 = vtanh.pop %v516
    %v518 = vmul.f32 %v135, 1.442695
    %v519 = vpow.pop %v518
    %vm520 = vcmask 25600
    %521 = vst.msk [vmem:[#allocation4] sm:$0x3] %vm520, %v517
    %v522 = vlaneseq
    %v523 = vshrl.u32 %v522, 7
    %v524 = vsub.s32 0, %v523
    %v525 = vrot.slane %v519, %v524
    %v526 = vadd.f32 %v525, 0.0
    %s527 = scalar_lea.vmem [#allocation4], 2
    %528 = vst.msk [vmem:[%s527] sm:$0x3] %vm520, %v526
    // Predicated region
    $region14: #{tpu_custom_call.1} parent=1 // pred_check
      _
    $region15: #{tpu_custom_call.1} parent=1 // pred_check_branch
      %530 = sbr.rel (0) target = $region17
    $region16: #{tpu_custom_call.1} parent=1 // pred_region
      %s532 = ssub.s32 64, 64
      %533 = vsyncadd [#allocation5], %s532
      %s534 = sshll.u32 [#allocation4], 4
      %s535 = int_to_ptr.vmem [resolvable:$true] %s534
      %540 = dma.vmem_to_hbm [thread:$0]  %s535, 64, %s4, [#allocation5], 32, 32, 2
    $region17: #{tpu_custom_call.1} parent=1 // pred_fallthru
      _
    // Predicated region
    $region18: #{tpu_custom_call.1} parent=1 // pred_check
      _
    $region19: #{tpu_custom_call.1} parent=1 // pred_check_branch
      %542 = sbr.rel (0) target = $region21
    $region20: #{tpu_custom_call.1} parent=1 // pred_region
      %543 = dma.done [#allocation5], 64
    $region21: #{tpu_custom_call.1} parent=1 // pred_fallthru
      _
    %544 = vsyncpa [#allocation5], 1

</llo_original>
